<compile_context>
chip_gen: v7x
topology: tpu7x:2x2x1
jax: 0.10.0
libtpu: 0.0.40
codegen_flags: <defaults>
</compile_context>

<pallas_src>
import functools

import numpy as np
import jax
import jax.numpy as jnp
from jax.experimental import pallas as pl
from jax.experimental.pallas import tpu as pltpu


def _round_up(v, mult):
    return (v + mult - 1) // mult * mult


def _device_kind():
    try:
        return jax.devices()[0].device_kind.lower()
    except Exception:
        return ""


def _arcface_tile_kernel(lab_ref, x_ref, w_ref, out_ref, *,
                         s, cos_m, sin_m, th, mm, c_valid, tc, fast_eup, mask_last):
    """One (TB x TC) tile of the ArcFace + BCE-with-logits loss.

    The output block (lane-dense per-row partial BCE sums, (TB, 128)) is indexed only by the
    batch axis, so it stays resident in VMEM across the class sweep and acts as the accumulator
    for the reduction (class) axis.
    """
    j = pl.program_id(1)

    @pl.when(j == 0)
    def _init():
        out_ref[...] = jnp.zeros_like(out_ref)

    # Inputs are pre-normalized in the wrapper, so the MXU output *is* the cosine
    # (bf16 operands by default, f32 accumulation).
    cosine = jax.lax.dot_general(
        x_ref[...], w_ref[...], (((1,), (1,)), ((), ())),
        preferred_element_type=jnp.float32)                     # (TB, TC) f32

    # ArcFace margin (easy_margin=False); elementwise math in f32 on the VPU/EUP.
    sine = jnp.sqrt(jnp.clip(1.0 - cosine * cosine, 0.0, 1.0))
    phi = cosine * cos_m - sine * sin_m
    phi = jnp.where(cosine > th, phi, cosine - mm)

    # Reproduce the reference exactly: the *raw integer* label (TB,1) broadcasts against
    # (TB,TC) — not its one-hot — in the phi/cosine blend.
    lab = lab_ref[...]                                           # (TB, 1) int32
    lab_f = lab.astype(jnp.float32)
    logits = (cosine + lab_f * (phi - cosine)) * s               # == (lab*phi + (1-lab)*cosine)*s

    # one_hot(target) against the *global* class index of this tile.
    cls = tc * j + jax.lax.broadcasted_iota(jnp.int32, logits.shape, 1)
    y = (cls == lab).astype(jnp.float32)

    # Numerically stable BCE-with-logits.  The softplus (exp + log1p) term is the EUP-heavy
    # part; on v6e/v7x it can run in bf16 (the large max/logits*y terms stay f32).
    if fast_eup:
        softplus = jnp.log1p(jnp.exp((-jnp.abs(logits)).astype(jnp.bfloat16))).astype(jnp.float32)
    else:
        softplus = jnp.log1p(jnp.exp(-jnp.abs(logits)))
    bce = jnp.maximum(logits, 0.0) - logits * y + softplus

    def _accumulate(vals):
        # Lane-dense accumulation: fold the TC/128 lane groups with vreg-aligned adds and add
        # into the resident (TB, 128) accumulator.  The final cross-lane reduce happens in the
        # wrapper, keeping the hot-loop store unmasked and lane-dense.
        groups = vals.shape[1] // 128
        acc = vals[:, 0:128]
        for g in range(1, groups):
            acc = acc + vals[:, g * 128:(g + 1) * 128]
        out_ref[...] += acc

    if not mask_last:
        # C is a multiple of TC: no padded class columns anywhere.
        _accumulate(bce)
    else:
        last = pl.num_programs(1) - 1

        @pl.when(j != last)
        def _interior():
            _accumulate(bce)

        @pl.when(j == last)
        def _edge():
            # Only the last class tile carries padded columns; mask them here.
            _accumulate(jnp.where(cls < c_valid, bce, 0.0))


def arcface_loss(x, w, label, *, s=30.0, m=0.5, matmul_dtype=jnp.bfloat16,
                 tb=256, tc=2048, fast_eup=None, min_batch_tiles=None, w_buffers=None):
    """x: (B, D), w: (C, D), label: (B, 1) int -> scalar f32 loss.

    matmul_dtype: dtype fed to the MXU (bf16 halves HBM traffic on the streamed (C, D)
    weight matrix, which is the roofline at real class counts).
    fast_eup: run the softplus transcendentals in bf16 (auto: on for v6e/v7x, off for v5e).
    """
    B, D = x.shape
    C, D2 = w.shape
    assert D == D2
    label = jnp.reshape(label, (B, 1)).astype(jnp.int32)

    kind = _device_kind()
    is_v5 = "v5" in kind
    is_v7 = "v7" in kind
    if fast_eup is None:
        fast_eup = not is_v5                 # bf16 EUP only where the EUP supports bf16
    if min_batch_tiles is None:
        min_batch_tiles = 2 if is_v7 else 1  # keep both v7x TensorCores busy on the batch axis
    if w_buffers is None:
        w_buffers = 3 if is_v5 else 2        # deeper w pipeline on v5e's slower HBM

    # L2-normalize in f32 *before* any cast (eps applied to the squared norm keeps
    # F.normalize(eps=1e-12) semantics); done once here instead of per (TB,TC) tile.
    x32 = x.astype(jnp.float32)
    w32 = w.astype(jnp.float32)
    eps2 = 1e-24
    xn = x32 * jax.lax.rsqrt(jnp.maximum(jnp.sum(x32 * x32, axis=1, keepdims=True), eps2))
    wn = w32 * jax.lax.rsqrt(jnp.maximum(jnp.sum(w32 * w32, axis=1, keepdims=True), eps2))

    # Lane/sublane-friendly tiling.  D_pad stays 128-aligned: padding small D to 256 would
    # only help MXU pass utilization marginally while doubling the DMA'd zeros in w.
    D_pad = _round_up(D, 128)
    tc = _round_up(int(tc), 128)
    TC = min(tc, _round_up(C, 128))
    C_pad = _round_up(C, TC)

    # TB chosen to minimize batch-padding waste; at least `min_batch_tiles` batch tiles.
    nb = -(-B // int(tb))
    if B > 8:
        nb = max(nb, int(min_batch_tiles))
    TB = _round_up(-(-B // nb), 8)
    B_pad = nb * TB

    xp = jnp.zeros((B_pad, D_pad), matmul_dtype).at[:B, :D].set(xn.astype(matmul_dtype))
    wp = jnp.zeros((C_pad, D_pad), matmul_dtype).at[:C, :D].set(wn.astype(matmul_dtype))
    labp = jnp.zeros((B_pad, 1), jnp.int32).at[:B, :].set(label)

    grid = (B_pad // TB, C_pad // TC)
    elt = jnp.dtype(matmul_dtype).itemsize

    # w spec: streamed tile-by-tile; deeper pipelining on v5e.
    w_index_map = lambda i, j: (j, 0)
    if int(w_buffers) != 2:
        try:
            w_spec = pl.BlockSpec((TC, D_pad), w_index_map,
                                  pipeline_mode=pl.Buffered(int(w_buffers)))
        except (TypeError, AttributeError):
            w_spec = pl.BlockSpec((TC, D_pad), w_index_map)
    else:
        w_spec = pl.BlockSpec((TC, D_pad), w_index_map)

    # VMEM budget: pipelined w buffers + x tile + f32 elementwise temps + accumulator,
    # with headroom, capped at 48 MiB (safe on v7x's 64 MiB per-TensorCore VMEM).
    vmem_est = (max(int(w_buffers), 2) * TC * D_pad * elt
                + 2 * TB * D_pad * elt
                + 8 * TB * TC * 4
                + 2 * TB * 128 * 4)
    vmem_limit = int(min(max(32 * 1024 * 1024, int(vmem_est * 1.3)), 48 * 1024 * 1024))

    kernel = functools.partial(
        _arcface_tile_kernel,
        s=float(s),
        cos_m=float(np.cos(m)),
        sin_m=float(np.sin(m)),
        th=float(np.cos(np.pi - m)),
        mm=float(np.sin(np.pi - m) * m),
        c_valid=int(C),
        tc=int(TC),
        fast_eup=bool(fast_eup),
        mask_last=bool(C % TC != 0),
    )

    row_sums = pl.pallas_call(
        kernel,
        out_shape=jax.ShapeDtypeStruct((B_pad, 128), jnp.float32),
        grid_spec=pltpu.PrefetchScalarGridSpec(
            num_scalar_prefetch=0,
            grid=grid,
            in_specs=[
                pl.BlockSpec((TB, 1), lambda i, j: (i, 0)),        # integer labels
                pl.BlockSpec((TB, D_pad), lambda i, j: (i, 0)),    # x tile (resident over class sweep)
                w_spec,                                            # w tile (streamed)
            ],
            out_specs=pl.BlockSpec((TB, 128), lambda i, j: (i, 0)),  # lane-dense per-row accumulator
        ),
        compiler_params=pltpu.CompilerParams(
            dimension_semantics=("parallel", "arbitrary"),
            vmem_limit_bytes=vmem_limit,
        ),
        cost_estimate=pl.CostEstimate(
            flops=2 * B_pad * C_pad * D_pad,
            transcendentals=3 * B_pad * C_pad,
            bytes_accessed=grid[0] * C_pad * D_pad * elt + B_pad * D_pad * elt
                           + B_pad * 4 + B_pad * 128 * 4,
        ),
    )(labp, xp, wp)

    # Drop padded batch rows; finish the (cheap) cross-lane / cross-row reduction here.
    # Mean divisor is the original B*C (padded class columns were masked in-kernel).
    return jnp.sum(row_sums[:B, :]) * (1.0 / float(B * C))


def _reference_loss(x, w, label, *, s=30.0, m=0.5):
    """Pure-JAX replica of the PyTorch forward (f32 everywhere)."""
    eps = 1e-12
    xn = x / jnp.maximum(jnp.linalg.norm(x, axis=1, keepdims=True), eps)
    wn = w / jnp.maximum(jnp.linalg.norm(w, axis=1, keepdims=True), eps)
    cosine = xn @ wn.T
    sine = jnp.sqrt(jnp.clip(1.0 - cosine ** 2, 0.0, 1.0))
    phi = cosine * np.cos(m) - sine * np.sin(m)
    phi = jnp.where(cosine > np.cos(np.pi - m), phi, cosine - np.sin(np.pi - m) * m)
    lab_f = label.astype(jnp.float32)
    logits = (lab_f * phi + (1.0 - lab_f) * cosine) * s
    y = jax.nn.one_hot(label[:, 0], w.shape[0], dtype=jnp.float32)
    bce = jnp.maximum(logits, 0.0) - logits * y + jnp.log1p(jnp.exp(-jnp.abs(logits)))
    return jnp.mean(bce)


if __name__ == "__main__":
    B, D, C = 8, 32, 16  # batch, embedding_size, num_classes

    key = jax.random.PRNGKey(0)
    kx, kw, kl = jax.random.split(key, 3)

    x = jax.random.normal(kx, (B, D), dtype=jnp.float32)

    # Deterministic xavier_uniform_-style init for weight (out_features, in_features).
    bound = float(np.sqrt(6.0 / (D + C)))
    w = jax.random.uniform(kw, (C, D), dtype=jnp.float32, minval=-bound, maxval=bound)

    label = jax.random.randint(kl, (B, 1), 0, C, dtype=jnp.int32)

    ref = jax.block_until_ready(_reference_loss(x, w, label))

    # Strict correctness check: f32 MXU operands, f32 transcendentals.
    loss_f32 = jax.block_until_ready(
        arcface_loss(x, w, label, matmul_dtype=jnp.float32, fast_eup=False))
    np.testing.assert_allclose(np.asarray(loss_f32), np.asarray(ref), rtol=1e-3, atol=1e-3)

    # Production fast path (bf16 MXU operands, auto bf16 EUP on v6e/v7x) — looser tolerance.
    loss_fast = jax.block_until_ready(arcface_loss(x, w, label))
    np.testing.assert_allclose(np.asarray(loss_fast), np.asarray(ref), rtol=5e-2, atol=5e-2)

    print("KERNEL_OK")
</pallas_src>

<mosaic_0001>
module attributes {stable_mosaic.version = 11 : i64} {
  func.func @_arcface_tile_kernel(%arg0: i32, %arg1: i32, %arg2: memref<8x1xi32, #tpu.memory_space<vmem>>, %arg3: memref<8x128xf32, #tpu.memory_space<vmem>>, %arg4: memref<128x128xf32, #tpu.memory_space<vmem>>, %arg5: memref<8x128xf32, #tpu.memory_space<vmem>>) attributes {dimension_semantics = [#tpu.dimension_semantics<parallel>, #tpu.dimension_semantics<arbitrary>], iteration_bounds = array<i64: 1, 1>, scalar_prefetch = 0 : i64, scratch_operands = 0 : i64, tpu.core_type = #tpu.core_type<tc>, window_params = [{transform_indices = @transform_0, window_bounds = array<i64: 8, 1>}, {transform_indices = @transform_1, window_bounds = array<i64: 8, 128>}, {transform_indices = @transform_2, window_bounds = array<i64: 128, 128>}, {transform_indices = @transform_3, window_bounds = array<i64: 8, 128>}]} {
    %c0_i32 = arith.constant 0 : i32
    %0 = arith.cmpi eq, %arg1, %c0_i32 : i32
    %1 = arith.extui %0 : i1 to i32
    %c0_i32_0 = arith.constant 0 : i32
    %2 = arith.cmpi ne, %1, %c0_i32_0 : i32
    scf.if %2 {
      %cst_20 = arith.constant 0.000000e+00 : f32
      %56 = vector.broadcast %cst_20 : f32 to vector<8x128xf32>
      %c0_21 = arith.constant 0 : index
      %c0_22 = arith.constant 0 : index
      %57 = vector.load %arg5[%c0_21, %c0_22] : memref<8x128xf32, #tpu.memory_space<vmem>>, vector<8x128xf32>
      tpu.vector_store %arg5[%c0_21, %c0_22], %56 {strides = array<i32>} : memref<8x128xf32, #tpu.memory_space<vmem>>, vector<8x128xf32>,
    } else {
    }
    %c0 = arith.constant 0 : index
    %c0_1 = arith.constant 0 : index
    %3 = vector.load %arg3[%c0, %c0_1] : memref<8x128xf32, #tpu.memory_space<vmem>>, vector<8x128xf32>
    %c0_2 = arith.constant 0 : index
    %c0_3 = arith.constant 0 : index
    %4 = vector.load %arg4[%c0_2, %c0_3] : memref<128x128xf32, #tpu.memory_space<vmem>>, vector<128x128xf32>
    %cst = arith.constant dense<0.000000e+00> : vector<8x128xf32>
    %5 = tpu.matmul %3, %4, %cst {dimension_numbers = #tpu.dot_dimension_numbers<[1], [1], [0], [0], [0, 0, 1, 0], [], []>} : vector<8x128xf32>, vector<128x128xf32>, vector<8x128xf32> -> vector<8x128xf32>
    %6 = arith.mulf %5, %5 : vector<8x128xf32>
    %cst_4 = arith.constant 1.000000e+00 : f32
    %7 = vector.broadcast %cst_4 : f32 to vector<8x128xf32>
    %8 = arith.subf %7, %6 : vector<8x128xf32>
    %cst_5 = arith.constant 0.000000e+00 : f32
    %cst_6 = arith.constant 1.000000e+00 : f32
    %9 = vector.broadcast %cst_5 : f32 to vector<8x128xf32>
    %10 = arith.maximumf %9, %8 : vector<8x128xf32>
    %11 = vector.broadcast %cst_6 : f32 to vector<8x128xf32>
    %12 = arith.minimumf %11, %10 : vector<8x128xf32>
    %13 = math.sqrt %12 : vector<8x128xf32>
    %cst_7 = arith.constant 0.87758255 : f32
    %14 = vector.broadcast %cst_7 : f32 to vector<8x128xf32>
    %15 = arith.mulf %5, %14 : vector<8x128xf32>
    %cst_8 = arith.constant 0.47942555 : f32
    %16 = vector.broadcast %cst_8 : f32 to vector<8x128xf32>
    %17 = arith.mulf %13, %16 : vector<8x128xf32>
    %18 = arith.subf %15, %17 : vector<8x128xf32>
    %cst_9 = arith.constant -0.87758255 : f32
    %19 = vector.broadcast %cst_9 : f32 to vector<8x128xf32>
    %20 = arith.cmpf ogt, %5, %19 : vector<8x128xf32>
    %cst_10 = arith.constant 0.239712775 : f32
    %21 = vector.broadcast %cst_10 : f32 to vector<8x128xf32>
    %22 = arith.subf %5, %21 : vector<8x128xf32>
    %23 = arith.select %20, %18, %22 : vector<8x128xi1>, vector<8x128xf32>
    %c0_11 = arith.constant 0 : index
    %c0_12 = arith.constant 0 : index
    %24 = vector.load %arg2[%c0_11, %c0_12] : memref<8x1xi32, #tpu.memory_space<vmem>>, vector<8x1xi32>
    %25 = arith.sitofp %24 : vector<8x1xi32> to vector<8x1xf32>
    %26 = arith.subf %23, %5 : vector<8x128xf32>
    %27 = vector.broadcast %25 : vector<8x1xf32> to vector<8x128xf32>
    %28 = arith.mulf %27, %26 : vector<8x128xf32>
    %29 = arith.addf %5, %28 : vector<8x128xf32>
    %cst_13 = arith.constant 3.000000e+01 : f32
    %30 = vector.broadcast %cst_13 : f32 to vector<8x128xf32>
    %31 = arith.mulf %29, %30 : vector<8x128xf32>
    %c128_i32 = arith.constant 128 : i32
    %32 = arith.muli %c128_i32, %arg1 : i32
    %33 = tpu.iota {dimensions = array<i32: 1>} : vector<8x128xi32>
    %34 = vector.broadcast %32 : i32 to vector<8x128xi32>
    %35 = arith.addi %34, %33 : vector<8x128xi32>
    %36 = vector.broadcast %24 : vector<8x1xi32> to vector<8x128xi32>
    %37 = arith.cmpi eq, %35, %36 : vector<8x128xi32>
    %38 = arith.extui %37 : vector<8x128xi1> to vector<8x128xi32>
    %39 = arith.sitofp %38 : vector<8x128xi32> to vector<8x128xf32>
    %40 = math.absf %31 : vector<8x128xf32>
    %cst_14 = arith.constant 0.000000e+00 : f32
    %41 = vector.broadcast %cst_14 : f32 to vector<8x128xf32>
    %42 = arith.subf %41, %40 : vector<8x128xf32>
    %43 = math.exp %42 : vector<8x128xf32>
    %44 = math.log1p %43 : vector<8x128xf32>
    %cst_15 = arith.constant 0.000000e+00 : f32
    %45 = vector.broadcast %cst_15 : f32 to vector<8x128xf32>
    %46 = arith.maximumf %31, %45 : vector<8x128xf32>
    %47 = arith.mulf %31, %39 : vector<8x128xf32>
    %48 = arith.subf %46, %47 : vector<8x128xf32>
    %49 = arith.addf %48, %44 : vector<8x128xf32>
    %c0_i32_16 = arith.constant 0 : i32
    %50 = arith.cmpi ne, %arg1, %c0_i32_16 : i32
    %51 = arith.extui %50 : i1 to i32
    %c0_i32_17 = arith.constant 0 : i32
    %52 = arith.cmpi ne, %51, %c0_i32_17 : i32
    scf.if %52 {
      %c0_20 = arith.constant 0 : index
      %c0_21 = arith.constant 0 : index
      %56 = vector.load %arg5[%c0_20, %c0_21] : memref<8x128xf32, #tpu.memory_space<vmem>>, vector<8x128xf32>
      %57 = arith.addf %56, %49 : vector<8x128xf32>
      %c0_22 = arith.constant 0 : index
      %c0_23 = arith.constant 0 : index
      %58 = vector.load %arg5[%c0_22, %c0_23] : memref<8x128xf32, #tpu.memory_space<vmem>>, vector<8x128xf32>
      tpu.vector_store %arg5[%c0_22, %c0_23], %57 {strides = array<i32>} : memref<8x128xf32, #tpu.memory_space<vmem>>, vector<8x128xf32>,
    } else {
    }
    %c0_i32_18 = arith.constant 0 : i32
    %53 = arith.cmpi eq, %arg1, %c0_i32_18 : i32
    %54 = arith.extui %53 : i1 to i32
    %c0_i32_19 = arith.constant 0 : i32
    %55 = arith.cmpi ne, %54, %c0_i32_19 : i32
    scf.if %55 {
      %c16_i32 = arith.constant 16 : i32
      %56 = vector.broadcast %c16_i32 : i32 to vector<8x128xi32>
      %57 = arith.cmpi slt, %35, %56 : vector<8x128xi32>
      %cst_20 = arith.constant 0.000000e+00 : f32
      %58 = vector.broadcast %cst_20 : f32 to vector<8x128xf32>
      %59 = arith.select %57, %49, %58 : vector<8x128xi1>, vector<8x128xf32>
      %c0_21 = arith.constant 0 : index
      %c0_22 = arith.constant 0 : index
      %60 = vector.load %arg5[%c0_21, %c0_22] : memref<8x128xf32, #tpu.memory_space<vmem>>, vector<8x128xf32>
      %61 = arith.addf %60, %59 : vector<8x128xf32>
      %c0_23 = arith.constant 0 : index
      %c0_24 = arith.constant 0 : index
      %62 = vector.load %arg5[%c0_23, %c0_24] : memref<8x128xf32, #tpu.memory_space<vmem>>, vector<8x128xf32>
      tpu.vector_store %arg5[%c0_23, %c0_24], %61 {strides = array<i32>} : memref<8x128xf32, #tpu.memory_space<vmem>>, vector<8x128xf32>,
    } else {
    }
    return
  }
  func.func @transform_0(%arg0: i32, %arg1: i32) -> (i32, i32) {
    %c0_i32 = arith.constant 0 : i32
    %c0_i32_0 = arith.constant 0 : i32
    return %arg0, %c0_i32 : i32, i32
  }
  func.func @transform_1(%arg0: i32, %arg1: i32) -> (i32, i32) {
    %c0_i32 = arith.constant 0 : i32
    %c0_i32_0 = arith.constant 0 : i32
    return %arg0, %c0_i32 : i32, i32
  }
  func.func @transform_2(%arg0: i32, %arg1: i32) -> (i32, i32) {
    %c0_i32 = arith.constant 0 : i32
    %c0_i32_0 = arith.constant 0 : i32
    return %arg1, %c0_i32 : i32, i32
  }
  func.func @transform_3(%arg0: i32, %arg1: i32) -> (i32, i32) {
    %c0_i32 = arith.constant 0 : i32
    %c0_i32_0 = arith.constant 0 : i32
    return %arg0, %c0_i32 : i32, i32
  }
}

</mosaic_0001>

<llo_original>
// kernel: tpu_custom_call.1
$region0: #{tpu_custom_call.1}
  #allocation0 [shape = 'u32[]', space=smem, size = 0x4, offset = 0x4, fixed_abs, tag = 'smem constant byte address 0x4 - core index']
  #allocation1 [shape = 'u32[144,128]{1,0:T(1,128)}', space=vmem, size = 0x12000, scoped, tag = 'internal scratch']
  %s0 = inlined_call_operand.vmem [shape: s32[8,1], index: 0, kind: input, shape index: {}]
  %s1 = inlined_call_operand.vmem [shape: f32[8,128], index: 1, kind: input, shape index: {}]
  %s2 = inlined_call_operand.hbm [shape: f32[128,128], index: 2, kind: input, shape index: {}]
  %s3 = inlined_call_operand.hbm [shape: f32[8,128], index: 3, kind: output, shape index: {}]
  %s4 = sld [smem:[#allocation0]]
  $region38: #{tpu_custom_call.1} parent=0
    _
  %s6 = ssub.s32 1, %s4
  %s7 = scalar_select 0, %s6, %s4
  $region1: #{tpu_custom_call.1} parent=0
    #allocation2 [shape = 'u8[65536]{0}', space=vmem, size = 0x10000, scoped, tag = 'input window, operand 2, single buffered']
    #allocation3 [shape = 's32[1]{0}', space=sflag, size = 0x4, scoped, tag = 'scoped memory for tpu_custom_call.1']
    #allocation4 [shape = 's32[1]{0}', space=sflag, size = 0x4, scoped, tag = 'scoped memory for tpu_custom_call.1']
    #allocation5 [shape = 'u8[4096]{0}', space=vmem, size = 0x1000, scoped, tag = 'output window, operand 0, single buffered']
    %8 = vsyncpa [#allocation3], 0
    %9 = vsyncpa [#allocation4], 0
    // Predicated region
    $region2: #{tpu_custom_call.1} parent=1 // pred_check
      _
    $region3: #{tpu_custom_call.1} parent=1 // pred_check_branch
      %11 = sbr.rel (0) target = $region5
    $region4: #{tpu_custom_call.1} parent=1 // pred_region
      _
    $region5: #{tpu_custom_call.1} parent=1 // pred_fallthru
      _
    // Predicated region
    $region6: #{tpu_custom_call.1} parent=1 // pred_check
      _
    $region7: #{tpu_custom_call.1} parent=1 // pred_check_branch
      %13 = sbr.rel (0) target = $region9
    $region8: #{tpu_custom_call.1} parent=1 // pred_region
      _
    $region9: #{tpu_custom_call.1} parent=1 // pred_fallthru
      _
    // Predicated region
    $region10: #{tpu_custom_call.1} parent=1 // pred_check
      _
    $region11: #{tpu_custom_call.1} parent=1 // pred_check_branch
      %15 = sbr.rel (0) target = $region13
    $region12: #{tpu_custom_call.1} parent=1 // pred_region
      %s17 = ssub.s32 2048, 2048
      %18 = vsyncadd [#allocation3], %s17
      %s19 = sshll.u32 [#allocation2], 4
      %s20 = int_to_ptr.vmem [resolvable:$true] %s19
      %25 = dma.hbm_to_vmem [thread:$0]  %s2, 2048, %s20, [#allocation3], 128, 128, 8
    $region13: #{tpu_custom_call.1} parent=1 // pred_fallthru
      _
    // Predicated region
    $region14: #{tpu_custom_call.1} parent=1 // pred_check
      _
    $region15: #{tpu_custom_call.1} parent=1 // pred_check_branch
      %27 = sbr.rel (0) target = $region17
    $region16: #{tpu_custom_call.1} parent=1 // pred_region
      %28 = dma.done [#allocation3], 2048
    $region17: #{tpu_custom_call.1} parent=1 // pred_fallthru
      _
    %p29 = scmp.eq.s32.totalorder 0, 0
    // Predicated region
    $region18: #{tpu_custom_call.1} parent=1 // pred_check
      %p30 = pneg %p29
    $region19: #{tpu_custom_call.1} parent=1 // pred_check_branch
      %32 = sbr.rel (%p30) target = $region21
    $region20: #{tpu_custom_call.1} parent=1 // pred_region
      %33 = vst [vmem:[#allocation5] sm:$0xff] 0.0
    $region21: #{tpu_custom_call.1} parent=1 // pred_fallthru
      _
    %v34 = vld [vmem:[%s1] sm:$0xff]
    %v35 = vld [vmem:[#allocation2] sm:$0xff]
    %v36 = vld [vmem:[#allocation2 + $0x8] sm:$0xff]
    %v37 = vld [vmem:[#allocation2 + $0x10] sm:$0xff]
    %v38 = vld [vmem:[#allocation2 + $0x18] sm:$0xff]
    %v39 = vld [vmem:[#allocation2 + $0x20] sm:$0xff]
    %v40 = vld [vmem:[#allocation2 + $0x28] sm:$0xff]
    %v41 = vld [vmem:[#allocation2 + $0x30] sm:$0xff]
    %v42 = vld [vmem:[#allocation2 + $0x38] sm:$0xff]
    %v43 = vld [vmem:[#allocation2 + $0x40] sm:$0xff]
    %v44 = vld [vmem:[#allocation2 + $0x48] sm:$0xff]
    %v45 = vld [vmem:[#allocation2 + $0x50] sm:$0xff]
    %v46 = vld [vmem:[#allocation2 + $0x58] sm:$0xff]
    %v47 = vld [vmem:[#allocation2 + $0x60] sm:$0xff]
    %v48 = vld [vmem:[#allocation2 + $0x68] sm:$0xff]
    %v49 = vld [vmem:[#allocation2 + $0x70] sm:$0xff]
    %v50 = vld [vmem:[#allocation2 + $0x78] sm:$0xff]
    %51 = vmatprep.subr.mxu0 0.0
    %52 = vmatpush1.xpose.msra.mxu0 %v35
    %53 = vmatprep.subr.mxu0 0.0
    %54 = vmatpush1.xpose.msra.mxu0 %v36
    %55 = vmatprep.subr.mxu0 0.0
    %56 = vmatpush1.xpose.msra.mxu0 %v37
    %57 = vmatprep.subr.mxu0 0.0
    %58 = vmatpush1.xpose.msra.mxu0 %v38
    %59 = vmatprep.subr.mxu0 0.0
    %60 = vmatpush1.xpose.msra.mxu0 %v39
    %61 = vmatprep.subr.mxu0 0.0
    %62 = vmatpush1.xpose.msra.mxu0 %v40
    %63 = vmatprep.subr.mxu0 0.0
    %64 = vmatpush1.xpose.msra.mxu0 %v41
    %65 = vmatprep.subr.mxu0 0.0
    %66 = vmatpush1.xpose.msra.mxu0 %v42
    %67 = vmatprep.subr.mxu0 0.0
    %68 = vmatpush1.xpose.msra.mxu0 %v43
    %69 = vmatprep.subr.mxu0 0.0
    %70 = vmatpush1.xpose.msra.mxu0 %v44
    %71 = vmatprep.subr.mxu0 0.0
    %72 = vmatpush1.xpose.msra.mxu0 %v45
    %73 = vmatprep.subr.mxu0 0.0
    %74 = vmatpush1.xpose.msra.mxu0 %v46
    %75 = vmatprep.subr.mxu0 0.0
    %76 = vmatpush1.xpose.msra.mxu0 %v47
    %77 = vmatprep.subr.mxu0 0.0
    %78 = vmatpush1.xpose.msra.mxu0 %v48
    %79 = vmatprep.subr.mxu0 0.0
    %80 = vmatpush1.xpose.msra.mxu0 %v49
    %81 = vmatprep.subr.mxu0 0.0
    %82 = vmatpush1.xpose.msra.mxu0 %v50
    %83 = vmatprep.subr.mxu0 0.0
    %84 = vmatpush1.xpose.msra.mxu0 0.0
    %85 = vmatprep.subr.mxu0 0.0
    %86 = vmatpush1.xpose.msra.mxu0 0.0
    %87 = vmatprep.subr.mxu0 0.0
    %88 = vmatpush1.xpose.msra.mxu0 0.0
    %89 = vmatprep.subr.mxu0 0.0
    %90 = vmatpush1.xpose.msra.mxu0 0.0
    %91 = vmatprep.subr.mxu0 0.0
    %92 = vmatpush1.xpose.msra.mxu0 0.0
    %93 = vmatprep.subr.mxu0 0.0
    %94 = vmatpush1.xpose.msra.mxu0 0.0
    %95 = vmatprep.subr.mxu0 0.0
    %96 = vmatpush1.xpose.msra.mxu0 0.0
    %97 = vmatprep.subr.mxu0 0.0
    %98 = vmatpush1.xpose.msra.mxu0 0.0
    %99 = vmatprep.subr.mxu0 0.0
    %100 = vmatpush1.xpose.msra.mxu0 0.0
    %101 = vmatprep.subr.mxu0 0.0
    %102 = vmatpush1.xpose.msra.mxu0 0.0
    %103 = vmatprep.subr.mxu0 0.0
    %104 = vmatpush1.xpose.msra.mxu0 0.0
    %105 = vmatprep.subr.mxu0 0.0
    %106 = vmatpush1.xpose.msra.mxu0 0.0
    %107 = vmatprep.subr.mxu0 0.0
    %108 = vmatpush1.xpose.msra.mxu0 0.0
    %109 = vmatprep.subr.mxu0 0.0
    %110 = vmatpush1.xpose.msra.mxu0 0.0
    %111 = vmatprep.subr.mxu0 0.0
    %112 = vmatpush1.xpose.msra.mxu0 0.0
    %113 = vmatprep.subr.mxu0 0.0
    %114 = vmatpush1.xpose.msra.mxu0 0.0
    %115 = vmatprep.mubr.f32.mxu0 0.0
    %116 = vmatmul.mubr.f32.gmra.mrb[0].mxu0 %v34
    %v117 = vpop.f32.mrb[0].mxu0
    %v118 = vadd.f32 0.0, %v117
    %v119 = vpop.f32.mrb[0].mxu0
    %120 = vdwg.mxu0
    %v121 = vmul.f32 %v118, %v118
    %v122 = vsub.f32 1.0, %v121
    %v123 = vmax.f32 %v122, 0.0
    %v124 = vmin.f32 %v123, 1.0
    %v125 = vrsqrt.pop %v124
    %v126 = vmul.f32 %v124, %v125
    %vm127 = vcmp.eq.f32.partialorder %v124, inf
    %v128 = vsel %vm127, %v124, %v126
    %vm129 = vcmp.eq.f32.partialorder %v124, 0.0
    %v130 = vand.u32 %v124, 2147483648
    %v131 = vsel %vm129, %v130, %v128
    %v132 = vmul.f32 %v118, 0.87758255
    %v133 = vmul.f32 %v131, 0.47942555
    %v134 = vsub.f32 %v132, %v133
    %vm135 = vcmp.gt.f32.partialorder %v118, -0.87758255
    %v136 = vsub.f32 %v118, 0.23971277
    %v137 = vsel %vm135, %v134, %v136
    %v138 = vld [vmem:[%s0] sm:$0xff]
    %v139 = vcvt.s32.f32 %v138
    %v140 = vsub.f32 %v137, %v118
    %142 = vset.pattern.permute.xlu0 0
    %143 = vperm.xlu0 %142, %v139
    %v144 = vpop.permute.xlu0 %143
    %v146 = vmul.f32 %v144, %v140
    %v147 = vadd.f32 %v118, %v146
    %v148 = vmul.f32 %v147, 30.0
    %s149 = smul.u32 0, 128
    %v150 = vlaneseq
    %v151 = vand.u32 %v150, 127
    %v152 = vstv %s149
    %v153 = vadd.s32 %v152, %v151
    %154 = vset.pattern.permute.xlu0 0
    %155 = vperm.xlu0 %154, %v138
    %v156 = vpop.permute.xlu0 %155
    %vm157 = vcmp.eq.s32.totalorder %v153, %v156
    %v158 = vsel %vm157, 1, 0
    %v159 = vcvt.s32.f32 %v158
    %v160 = vand.u32 2147483647, %v148
    %v161 = vsub.f32 0.0, %v160
    %v162 = vmul.f32 %v161, 1.442695
    %v163 = vpow.pop %v162
    %v164 = vadd.f32 %v163, 1.0
    %v165 = vlog2.pop %v164
    %v166 = vmul.f32 %v165, 0.6931472
    %v167 = vmul.f32 -0.5, %v163
    %v168 = vadd.f32 %v167, 1.0
    %v169 = vmul.f32 %v168, %v163
    %v170 = vand.u32 2147483647, %v163
    %vm171 = vcmp.lt.f32.partialorder %v170, 0.0004427343
    %v172 = vsel %vm171, %v169, %v166
    %v173 = vmax.f32 %v148, 0.0
    %v174 = vmul.f32 %v148, %v159
    %v175 = vsub.f32 %v173, %v174
    %v176 = vadd.f32 %v175, %v172
    %p177 = scmp.ne.s32.totalorder 0, 0
    // Predicated region
    $region22: #{tpu_custom_call.1} parent=1 // pred_check
      %p178 = pneg %p177
    $region23: #{tpu_custom_call.1} parent=1 // pred_check_branch
      %180 = sbr.rel (%p178) target = $region25
    $region24: #{tpu_custom_call.1} parent=1 // pred_region
      %v181 = vld [vmem:[#allocation5] sm:$0xff]
      %v182 = vadd.f32 %v181, %v176
      %183 = vst [vmem:[#allocation5] sm:$0xff] %v182
    $region25: #{tpu_custom_call.1} parent=1 // pred_fallthru
      _
    // Predicated region
    $region26: #{tpu_custom_call.1} parent=1 // pred_check
      %p184 = pneg %p29
    $region27: #{tpu_custom_call.1} parent=1 // pred_check_branch
      %186 = sbr.rel (%p184) target = $region29
    $region28: #{tpu_custom_call.1} parent=1 // pred_region
      %vm187 = vcmp.lt.s32.totalorder %v153, 16
      %v188 = vsel %vm187, %v176, 0.0
      %v189 = vld [vmem:[#allocation5] sm:$0xff]
      %v190 = vadd.f32 %v189, %v188
      %191 = vst [vmem:[#allocation5] sm:$0xff] %v190
    $region29: #{tpu_custom_call.1} parent=1 // pred_fallthru
      _
    // Predicated region
    $region30: #{tpu_custom_call.1} parent=1 // pred_check
      _
    $region31: #{tpu_custom_call.1} parent=1 // pred_check_branch
      %193 = sbr.rel (0) target = $region33
    $region32: #{tpu_custom_call.1} parent=1 // pred_region
      %s195 = ssub.s32 128, 128
      %196 = vsyncadd [#allocation4], %s195
      %s198 = sshll.u32 [#allocation5], 4
      %s199 = int_to_ptr.vmem [resolvable:$true] %s198
      %201 = dma.vmem_to_hbm [thread:$0]  %s199, 128, %s3, [#allocation4]
    $region33: #{tpu_custom_call.1} parent=1 // pred_fallthru
      _
    // Predicated region
    $region34: #{tpu_custom_call.1} parent=1 // pred_check
      _
    $region35: #{tpu_custom_call.1} parent=1 // pred_check_branch
      %203 = sbr.rel (0) target = $region37
    $region36: #{tpu_custom_call.1} parent=1 // pred_region
      %204 = dma.done [#allocation4], 128
    $region37: #{tpu_custom_call.1} parent=1 // pred_fallthru
      _
    %205 = vsyncpa [#allocation3], 1
    %206 = vsyncpa [#allocation4], 1

</llo_original>
